<compile_context>
chip_gen: v7x
topology: tpu7x:2x2x1
jax: 0.10.0
libtpu: 0.0.40
codegen_flags: <defaults>
</compile_context>

<pallas_src>
import numpy as np
import jax
import jax.numpy as jnp
from jax.experimental import pallas as pl
from jax.experimental.pallas import tpu as pltpu


def _round_up(v, m):
    return (v + m - 1) // m * m


# ---------------------------------------------------------------------------
# One-time probe: which sign convention does pltpu.roll use on each axis?
# (keeps the packed layout correct regardless of rotate direction)
# ---------------------------------------------------------------------------
def _probe_roll_directions(rows, cols):
    x_np = np.arange(rows * cols, dtype=np.float32).reshape(rows, cols)

    def kern(x_ref, r_ref, c_ref):
        r_ref[...] = pltpu.roll(x_ref[...], 1, axis=0)
        c_ref[...] = pltpu.roll(x_ref[...], 1, axis=1)

    vmem = pl.BlockSpec(memory_space=pltpu.MemorySpace.VMEM)
    r, c = pl.pallas_call(
        kern,
        out_shape=(jax.ShapeDtypeStruct((rows, cols), jnp.float32),
                   jax.ShapeDtypeStruct((rows, cols), jnp.float32)),
        in_specs=[vmem],
        out_specs=(vmem, vmem),
    )(jnp.asarray(x_np))
    r = np.asarray(jax.block_until_ready(r))
    c = np.asarray(jax.block_until_ready(c))

    def direction(res, axis):
        if np.array_equal(res, np.roll(x_np, 1, axis=axis)):
            return True                       # numpy semantics: out[i] = in[i-shift]
        if np.array_equal(res, np.roll(x_np, -1, axis=axis)):
            return False                      # inverted:        out[i] = in[i+shift]
        raise RuntimeError(f"pltpu.roll semantics probe failed on axis {axis}")

    return direction(r, 0), direction(c, 1)


# ---------------------------------------------------------------------------
# Fused kernel factory (layout constants are baked in statically)
# ---------------------------------------------------------------------------
def _make_kernel(cfg):
    ROWS, WIDTH, XW = cfg["ROWS"], cfg["WIDTH"], cfg["XW"]
    offs, steps = cfg["offs"], cfg["steps"]
    n1, n2, H3 = cfg["n1"], cfg["n2"], cfg["H3"]
    sub_np, lane_np = cfg["roll_np"]

    def up_rows(a, k):            # out[r, :] = a[r + k, :]   (circular, XLU sublane roll)
        if k == 0:
            return a
        return pltpu.roll(a, (ROWS - k) if sub_np else k, axis=0)

    def up_lanes(a, k):           # out[:, c] = a[:, c + k]   (circular, XLU lane roll)
        if k == 0:
            return a
        return pltpu.roll(a, (WIDTH - k) if lane_np else k, axis=1)

    def kernel(x_ref, w_ref, o_ref):
        f32 = jnp.float32

        def conv_bn_relu(a, m_name, blk_rows, p, b_name):
            # conv3x3 (+folded BN) as 3 matmuls: sum_ki  roll_up(a, ki*p) @ M[ki]
            base = offs[m_name]
            acc = jnp.dot(a, w_ref[base:base + blk_rows, :],
                          preferred_element_type=f32)
            for ki in (1, 2):                                       # fully unrolled
                acc = acc + jnp.dot(
                    up_rows(a, ki * p),
                    w_ref[base + ki * blk_rows:base + (ki + 1) * blk_rows, :],
                    preferred_element_type=f32)
            boff = offs[b_name]
            return jnp.maximum(acc + w_ref[boff:boff + 1, :], 0.0)  # BN shift + ReLU

        def maxpool2x2(a, row_step, lane_step):
            a = jnp.maximum(a, up_rows(a, row_step))
            return jnp.maximum(a, up_lanes(a, lane_step))

        a = x_ref[...]                                          # [N*RS, XW]
        a = conv_bn_relu(a, "M1", XW, steps["c1"], "b1")        # conv1+bn1+relu
        a = maxpool2x2(a, steps["p1"], n1)                      # pool1 (2x2, s1); dropout1: id
        a = conv_bn_relu(a, "M2", WIDTH, steps["c2"], "b2")     # conv2+bn2+relu (s2 in M2)
        a = maxpool2x2(a, steps["p2"], n2)                      # pool2 (2x2, s2); dropout2: id
        a = conv_bn_relu(a, "M3", WIDTH, steps["c3"], "b3")     # conv3+bn3+relu (s2 in M3)

        # adaptive-avg-pool(1,1) + flatten + fc1 + relu:
        #   row-sum of the H3 valid rows via rolls; column-sum and the 1/(H3*W3)
        #   averaging factor are folded into WFC.  dropout3: identity (eval).
        s = a
        for i in range(1, H3):
            s = s + up_rows(a, i * steps["head"])
        wo, bo = offs["WFC"], offs["bfc"]
        y = jnp.dot(s, w_ref[wo:wo + WIDTH, :], preferred_element_type=f32) \
            + w_ref[bo:bo + 1, :]
        o_ref[...] = jnp.maximum(y, 0.0)                        # lane-dense [N*RS, WIDTH]

    return kernel


# ---------------------------------------------------------------------------
# Host-side parameter packing (pure numpy, done once)
# ---------------------------------------------------------------------------
def _fold_bn(w, b, g, be, m, v, eps=1e-5):
    w = np.asarray(w, np.float32)
    scale = np.asarray(g, np.float32) / np.sqrt(np.asarray(v, np.float32) + eps)
    shift = (np.asarray(b, np.float32) - np.asarray(m, np.float32)) * scale \
            + np.asarray(be, np.float32)
    return w * scale[:, None, None, None], shift


def _pack_conv(w_eff, cin, cout, ow, stride, in_lane_of, in_rows, out_cols):
    """M[ki] such that conv output col j*cout+oc comes from sum_ki rolled_act @ M[ki]."""
    M = np.zeros((3, in_rows, out_cols), np.float32)
    for ki in range(3):
        for kj in range(3):
            blk = np.asarray(w_eff[:, :, ki, kj], np.float32).T     # (cin, cout)
            for j in range(ow):
                r0 = in_lane_of(stride * j + kj)
                M[ki, r0:r0 + cin, j * cout:(j + 1) * cout] = blk
    return M


def _bias_row(shift, ow, cout, width):
    row = np.zeros((1, width), np.float32)
    for j in range(ow):
        row[0, j * cout:(j + 1) * cout] = shift
    return row


def build_model(raw, N, H, W, n1, n2, n3, n_classes, eps=1e-5):
    assert H == W, "square inputs assumed"
    # spatial extents of the reference network
    H1 = H - 2                          # conv1 k3 s1
    H1p = H1 - 1                        # pool1 k2 s1
    H2 = (H1p - 3) // 2 + 1             # conv2 k3 s2
    H2p = (H2 - 2) // 2 + 1             # pool2 k2 s2
    H3 = (H2p - 3) // 2 + 1             # conv3 k3 s2
    W1, W2, W3 = H1, H2, H3
    assert H3 >= 1

    RS = _round_up(H, 8)                # per-sample physical row stride (sublane aligned)
    ROWS = N * RS
    XW = _round_up(W * 3, 128)          # input lane width
    WIDTH = _round_up(max(W1 * n1, W2 * n2, W3 * n3, n_classes, 128), 128)

    # physical row step of each stage's *input* (stride accumulates; rows stay in place)
    pc1, pp1, pc2, pp2, pc3, phead = 1, 1, 1, 2, 4, 8

    # circular rolls must never pull wrapped data into *valid* output positions
    assert pc1 * ((H1 - 1) + 2) < RS
    assert pp1 * ((H1p - 1) + 1) < RS
    assert pc2 * (2 * (H2 - 1) + 2) < RS
    assert pp2 * (2 * (H2p - 1) + 1) < RS
    assert pc3 * (2 * (H3 - 1) + 2) < RS
    assert phead * (H3 - 1) < RS
    assert 3 * ((W1 - 1) + 2) + 3 <= XW
    assert n1 * (2 * (W2 - 1) + 2) + n1 <= WIDTH
    assert 2 * n2 * (2 * (W3 - 1) + 2) + n2 <= WIDTH
    assert max(W1 * n1, W2 * n2, W3 * n3, n_classes) <= WIDTH

    w1, s1 = _fold_bn(raw["w1"], raw["b1"], raw["g1"], raw["be1"], raw["m1"], raw["v1"], eps)
    w2, s2 = _fold_bn(raw["w2"], raw["b2"], raw["g2"], raw["be2"], raw["m2"], raw["v2"], eps)
    w3, s3 = _fold_bn(raw["w3"], raw["b3"], raw["g3"], raw["be3"], raw["m3"], raw["v3"], eps)

    # input col layout: spatial col c, channel ch -> lane 3*c + ch
    M1 = _pack_conv(w1, 3, n1, W1, 1, lambda c: 3 * c, XW, WIDTH)
    # conv1 output / pool1: spatial col c -> lane block n1*c
    M2 = _pack_conv(w2, n1, n2, W2, 2, lambda c: n1 * c, WIDTH, WIDTH)
    # conv2 output is compact at n2*c; pool2 (stride 2) keeps col c at lane 2*n2*c
    M3 = _pack_conv(w3, n2, n3, W3, 2, lambda c: 2 * n2 * c, WIDTH, WIDTH)
    b1 = _bias_row(s1, W1, n1, WIDTH)
    b2 = _bias_row(s2, W2, n2, WIDTH)
    b3 = _bias_row(s3, W3, n3, WIDTH)

    # global average pool + fc1: row-sum happens in-kernel via rolls; the column
    # sum and the 1/(H3*W3) averaging factor are folded into the fc weights.
    wfc = np.asarray(raw["wfc"], np.float32)                    # (n_classes, n3) torch layout
    WFC = np.zeros((WIDTH, WIDTH), np.float32)
    for j in range(W3):
        WFC[j * n3:(j + 1) * n3, :n_classes] = wfc.T / float(H3 * W3)
    bfc = np.zeros((1, WIDTH), np.float32)
    bfc[0, :n_classes] = np.asarray(raw["bfc"], np.float32)

    # ---- consolidate everything into ONE lane-dense slab (single DMA) ----
    blocks, offs = [], {}

    def add(name, arr):
        offs[name] = sum(b.shape[0] for b in blocks)
        blocks.append(np.asarray(arr, np.float32))

    add("M1", M1.reshape(3 * XW, WIDTH))
    add("M2", M2.reshape(3 * WIDTH, WIDTH))
    add("M3", M3.reshape(3 * WIDTH, WIDTH))
    add("WFC", WFC)
    add("b1", b1)
    add("b2", b2)
    add("b3", b3)
    add("bfc", bfc)
    w_slab = np.concatenate(blocks, axis=0)
    pad = _round_up(w_slab.shape[0], 8) - w_slab.shape[0]
    if pad:
        w_slab = np.concatenate([w_slab, np.zeros((pad, WIDTH), np.float32)], axis=0)

    sub_np_like, lane_np_like = _probe_roll_directions(ROWS, WIDTH)

    cfg = dict(ROWS=ROWS, WIDTH=WIDTH, XW=XW, offs=offs, n1=n1, n2=n2, H3=H3,
               steps=dict(c1=pc1, p1=pp1, c2=pc2, p2=pp2, c3=pc3, head=phead),
               roll_np=(sub_np_like, lane_np_like))
    kernel = _make_kernel(cfg)

    vmem = pl.BlockSpec(memory_space=pltpu.MemorySpace.VMEM)
    flops = 2 * ROWS * WIDTH * (3 * XW + 7 * WIDTH)
    bytes_accessed = 4 * (ROWS * XW + int(w_slab.size) + ROWS * WIDTH)
    call = pl.pallas_call(
        kernel,
        out_shape=jax.ShapeDtypeStruct((ROWS, WIDTH), jnp.float32),
        in_specs=[vmem, vmem],
        out_specs=vmem,
        cost_estimate=pl.CostEstimate(flops=int(flops), transcendentals=0,
                                      bytes_accessed=int(bytes_accessed)),
    )

    @jax.jit
    def forward(x_nchw, w):
        # single cheap layout op outside the kernel: NCHW -> padded [N*RS, XW]
        xh = jnp.transpose(x_nchw, (0, 2, 3, 1)).reshape(N, H, W * 3)
        xh = jnp.pad(xh, ((0, 0), (0, RS - H), (0, XW - W * 3)))
        x2 = xh.reshape(N * RS, XW).astype(jnp.float32)
        y = call(x2, w)
        # valid logits live at row n*RS, cols [0, n_classes)
        return y[::RS, :n_classes]

    w_dev = jnp.asarray(w_slab)
    return lambda x: forward(x, w_dev)


# ---------------------------------------------------------------------------
# Pure-JAX reference (eval-mode semantics of the PyTorch module)
# ---------------------------------------------------------------------------
def reference_forward(x, raw, eps=1e-5):
    hp = jax.lax.Precision.HIGHEST

    def conv(x, w, b, stride):
        y = jax.lax.conv_general_dilated(
            x, w, window_strides=(stride, stride), padding="VALID",
            dimension_numbers=("NCHW", "OIHW", "NCHW"), precision=hp)
        return y + b[None, :, None, None]

    def bn(x, g, be, m, v):
        inv = g / jnp.sqrt(v + eps)
        return (x - m[None, :, None, None]) * inv[None, :, None, None] \
               + be[None, :, None, None]

    def maxpool(x, k, s):
        return jax.lax.reduce_window(x, -jnp.inf, jax.lax.max,
                                     (1, 1, k, k), (1, 1, s, s), "VALID")

    y = jax.nn.relu(bn(conv(x, raw["w1"], raw["b1"], 1),
                       raw["g1"], raw["be1"], raw["m1"], raw["v1"]))
    y = maxpool(y, 2, 1)                                   # dropout1: identity (eval)
    y = jax.nn.relu(bn(conv(y, raw["w2"], raw["b2"], 2),
                       raw["g2"], raw["be2"], raw["m2"], raw["v2"]))
    y = maxpool(y, 2, 2)                                   # dropout2: identity (eval)
    y = jax.nn.relu(bn(conv(y, raw["w3"], raw["b3"], 2),
                       raw["g3"], raw["be3"], raw["m3"], raw["v3"]))
    y = jnp.mean(y, axis=(2, 3))                           # dropout3 + avgpool + flatten
    return jax.nn.relu(jnp.dot(y, raw["wfc"].T, precision=hp) + raw["bfc"][None, :])


# ---------------------------------------------------------------------------
# Main
# ---------------------------------------------------------------------------
if __name__ == "__main__":
    n1, n2, n3, n_classes = 8, 16, 32, 10
    dropout_rate = 0.5          # inference: dropout is identity
    N, H, W = 2, 32, 32

    key = jax.random.PRNGKey(0)
    ks = jax.random.split(key, 21)

    raw = {
        "w1": 0.2 * jax.random.normal(ks[0], (n1, 3, 3, 3), jnp.float32),
        "b1": 0.1 * jax.random.normal(ks[1], (n1,), jnp.float32),
        "g1": 1.0 + 0.1 * jax.random.normal(ks[2], (n1,), jnp.float32),
        "be1": 0.1 * jax.random.normal(ks[3], (n1,), jnp.float32),
        "m1": 0.1 * jax.random.normal(ks[4], (n1,), jnp.float32),
        "v1": jax.random.uniform(ks[5], (n1,), jnp.float32, 0.5, 1.5),

        "w2": 0.2 * jax.random.normal(ks[6], (n2, n1, 3, 3), jnp.float32),
        "b2": 0.1 * jax.random.normal(ks[7], (n2,), jnp.float32),
        "g2": 1.0 + 0.1 * jax.random.normal(ks[8], (n2,), jnp.float32),
        "be2": 0.1 * jax.random.normal(ks[9], (n2,), jnp.float32),
        "m2": 0.1 * jax.random.normal(ks[10], (n2,), jnp.float32),
        "v2": jax.random.uniform(ks[11], (n2,), jnp.float32, 0.5, 1.5),

        "w3": 0.2 * jax.random.normal(ks[12], (n3, n2, 3, 3), jnp.float32),
        "b3": 0.1 * jax.random.normal(ks[13], (n3,), jnp.float32),
        "g3": 1.0 + 0.1 * jax.random.normal(ks[14], (n3,), jnp.float32),
        "be3": 0.1 * jax.random.normal(ks[15], (n3,), jnp.float32),
        "m3": 0.1 * jax.random.normal(ks[16], (n3,), jnp.float32),
        "v3": jax.random.uniform(ks[17], (n3,), jnp.float32, 0.5, 1.5),

        "wfc": 0.2 * jax.random.normal(ks[18], (n_classes, n3), jnp.float32),
        "bfc": 0.1 * jax.random.normal(ks[19], (n_classes,), jnp.float32),
    }
    x = jax.random.normal(ks[20], (N, 3, H, W), jnp.float32)   # NCHW like PyTorch

    forward = build_model(raw, N, H, W, n1, n2, n3, n_classes)

    out = forward(x)
    jax.block_until_ready(out)
    assert out.shape == (N, n_classes) and out.dtype == jnp.float32

    # correctness check against a pure-JAX reference of the PyTorch module
    # (loose tolerance to allow for different MXU f32 accumulation paths)
    ref = reference_forward(x, raw)
    np.testing.assert_allclose(np.asarray(out), np.asarray(ref), rtol=1e-2, atol=1e-2)

    print("KERNEL_OK")
</pallas_src>

<mosaic_0001>
module attributes {stable_mosaic.version = 11 : i64} {
  func.func @kern(%arg0: memref<64x256xf32, #tpu.memory_space<vmem>>, %arg1: memref<64x256xf32, #tpu.memory_space<vmem>>, %arg2: memref<64x256xf32, #tpu.memory_space<vmem>>) attributes {dimension_semantics = [], scalar_prefetch = 0 : i64, scratch_operands = 0 : i64, tpu.core_type = #tpu.core_type<tc>} {
    %c0 = arith.constant 0 : index
    %c0_0 = arith.constant 0 : index
    %0 = vector.load %arg0[%c0, %c0_0] : memref<64x256xf32, #tpu.memory_space<vmem>>, vector<64x256xf32>
    %c1_i32 = arith.constant 1 : i32
    %1 = tpu.dynamic_rotate %0 by %c1_i32 dim 0 : vector<64x256xf32>, i32 -> vector<64x256xf32>
    %c0_1 = arith.constant 0 : index
    %c0_2 = arith.constant 0 : index
    %2 = vector.load %arg1[%c0_1, %c0_2] : memref<64x256xf32, #tpu.memory_space<vmem>>, vector<64x256xf32>
    tpu.vector_store %arg1[%c0_1, %c0_2], %1 {strides = array<i32>} : memref<64x256xf32, #tpu.memory_space<vmem>>, vector<64x256xf32>,
    %c0_3 = arith.constant 0 : index
    %c0_4 = arith.constant 0 : index
    %3 = vector.load %arg0[%c0_3, %c0_4] : memref<64x256xf32, #tpu.memory_space<vmem>>, vector<64x256xf32>
    %c1_i32_5 = arith.constant 1 : i32
    %4 = tpu.dynamic_rotate %3 by %c1_i32_5 dim 1 : vector<64x256xf32>, i32 -> vector<64x256xf32>
    %c0_6 = arith.constant 0 : index
    %c0_7 = arith.constant 0 : index
    %5 = vector.load %arg2[%c0_6, %c0_7] : memref<64x256xf32, #tpu.memory_space<vmem>>, vector<64x256xf32>
    tpu.vector_store %arg2[%c0_6, %c0_7], %4 {strides = array<i32>} : memref<64x256xf32, #tpu.memory_space<vmem>>, vector<64x256xf32>,
    return
  }
}

</mosaic_0001>

<llo_original>
// kernel: tpu_custom_call.1
$region0: #{tpu_custom_call.1}
  #allocation0 [shape = 'u32[]', space=smem, size = 0x4, offset = 0x4, fixed_abs, tag = 'smem constant byte address 0x4 - core index']
  #allocation1 [shape = 'u32[144,128]{1,0:T(1,128)}', space=vmem, size = 0x12000, scoped, tag = 'internal scratch']
  %s0 = inlined_call_operand.hbm [shape: f32[64,256], index: 0, kind: input, shape index: {}]
  %s1 = inlined_call_operand.hbm [shape: f32[64,256], index: 1, kind: output, shape index: {0}]
  %s2 = inlined_call_operand.hbm [shape: f32[64,256], index: 2, kind: output, shape index: {1}]
  %3 = xla_tuple %s1, %s2
  %s4 = sld [smem:[#allocation0]]
  $region26: #{tpu_custom_call.1} parent=0
    _
  %s6 = ssub.s32 1, %s4
  %s7 = scalar_select 0, %s6, %s4
  $region1: #{tpu_custom_call.1} parent=0
    #allocation2 [shape = 'u8[65536]{0}', space=vmem, size = 0x10000, scoped, tag = 'input window, operand 0, single buffered']
    #allocation3 [shape = 's32[1]{0}', space=sflag, size = 0x4, scoped, tag = 'scoped memory for tpu_custom_call.1']
    #allocation4 [shape = 's32[1]{0}', space=sflag, size = 0x4, scoped, tag = 'scoped memory for tpu_custom_call.1']
    #allocation5 [shape = 'u8[65536]{0}', space=vmem, size = 0x10000, scoped, tag = 'output window, operand 0, single buffered']
    #allocation6 [shape = 'u8[65536]{0}', space=vmem, size = 0x10000, scoped, tag = 'output window, operand 1, single buffered']
    #allocation7 [shape = 's32[1]{0}', space=sflag, size = 0x4, scoped, tag = 'scoped memory for tpu_custom_call.1']
    %8 = vsyncpa [#allocation3], 0
    %9 = vsyncpa [#allocation4], 0
    %10 = vsyncpa [#allocation7], 0
    // Predicated region
    $region2: #{tpu_custom_call.1} parent=1 // pred_check
      _
    $region3: #{tpu_custom_call.1} parent=1 // pred_check_branch
      %12 = sbr.rel (0) target = $region5
    $region4: #{tpu_custom_call.1} parent=1 // pred_region
      %s14 = ssub.s32 2048, 2048
      %15 = vsyncadd [#allocation3], %s14
      %s16 = sshll.u32 [#allocation2], 4
      %s17 = int_to_ptr.vmem [resolvable:$true] %s16
      %22 = dma.hbm_to_vmem [thread:$0]  %s0, 2048, %s17, [#allocation3], 256, 256, 16
    $region5: #{tpu_custom_call.1} parent=1 // pred_fallthru
      _
    // Predicated region
    $region6: #{tpu_custom_call.1} parent=1 // pred_check
      _
    $region7: #{tpu_custom_call.1} parent=1 // pred_check_branch
      %24 = sbr.rel (0) target = $region9
    $region8: #{tpu_custom_call.1} parent=1 // pred_region
      %25 = dma.done [#allocation3], 2048
    $region9: #{tpu_custom_call.1} parent=1 // pred_fallthru
      _
    %v26 = vld [vmem:[#allocation2] sm:$0xff]
    %v27 = vld [vmem:[#allocation2 + $0x8] sm:$0xff]
    %v28 = vld [vmem:[#allocation2 + $0x10] sm:$0xff]
    %v29 = vld [vmem:[#allocation2 + $0x18] sm:$0xff]
    %v30 = vld [vmem:[#allocation2 + $0x20] sm:$0xff]
    %v31 = vld [vmem:[#allocation2 + $0x28] sm:$0xff]
    %v32 = vld [vmem:[#allocation2 + $0x30] sm:$0xff]
    %v33 = vld [vmem:[#allocation2 + $0x38] sm:$0xff]
    %v34 = vld [vmem:[#allocation2 + $0x40] sm:$0xff]
    %v35 = vld [vmem:[#allocation2 + $0x48] sm:$0xff]
    %v36 = vld [vmem:[#allocation2 + $0x50] sm:$0xff]
    %v37 = vld [vmem:[#allocation2 + $0x58] sm:$0xff]
    %v38 = vld [vmem:[#allocation2 + $0x60] sm:$0xff]
    %v39 = vld [vmem:[#allocation2 + $0x68] sm:$0xff]
    %v40 = vld [vmem:[#allocation2 + $0x70] sm:$0xff]
    %v41 = vld [vmem:[#allocation2 + $0x78] sm:$0xff]
    %v42 = vrot.slane %v26, 7
    %v43 = vrot.slane %v27, 7
    %v44 = vrot.slane %v28, 7
    %v45 = vrot.slane %v29, 7
    %v46 = vrot.slane %v30, 7
    %v47 = vrot.slane %v31, 7
    %v48 = vrot.slane %v32, 7
    %v49 = vrot.slane %v33, 7
    %v50 = vrot.slane %v34, 7
    %v51 = vrot.slane %v35, 7
    %v52 = vrot.slane %v36, 7
    %v53 = vrot.slane %v37, 7
    %v54 = vrot.slane %v38, 7
    %v55 = vrot.slane %v39, 7
    %v56 = vrot.slane %v40, 7
    %v57 = vrot.slane %v41, 7
    %v58 = vlaneseq
    %v59 = vshrl.u32 %v58, 7
    %vm60 = vcmp.lt.s32.totalorder %v59, 1
    %v61 = vsel %vm60, %v54, %v56
    %v62 = vsel %vm60, %v55, %v57
    %v63 = vsel %vm60, %v52, %v54
    %v64 = vsel %vm60, %v53, %v55
    %v65 = vsel %vm60, %v50, %v52
    %v66 = vsel %vm60, %v51, %v53
    %v67 = vsel %vm60, %v48, %v50
    %v68 = vsel %vm60, %v49, %v51
    %v69 = vsel %vm60, %v46, %v48
    %v70 = vsel %vm60, %v47, %v49
    %v71 = vsel %vm60, %v44, %v46
    %v72 = vsel %vm60, %v45, %v47
    %v73 = vsel %vm60, %v42, %v44
    %v74 = vsel %vm60, %v43, %v45
    %v75 = vsel %vm60, %v56, %v42
    %v76 = vsel %vm60, %v57, %v43
    %77 = vst [vmem:[#allocation5] sm:$0xff] %v75
    %78 = vst [vmem:[#allocation5 + $0x8] sm:$0xff] %v76
    %79 = vst [vmem:[#allocation5 + $0x10] sm:$0xff] %v73
    %80 = vst [vmem:[#allocation5 + $0x18] sm:$0xff] %v74
    %81 = vst [vmem:[#allocation5 + $0x20] sm:$0xff] %v71
    %82 = vst [vmem:[#allocation5 + $0x28] sm:$0xff] %v72
    %83 = vst [vmem:[#allocation5 + $0x30] sm:$0xff] %v69
    %84 = vst [vmem:[#allocation5 + $0x38] sm:$0xff] %v70
    %85 = vst [vmem:[#allocation5 + $0x40] sm:$0xff] %v67
    %86 = vst [vmem:[#allocation5 + $0x48] sm:$0xff] %v68
    %87 = vst [vmem:[#allocation5 + $0x50] sm:$0xff] %v65
    %88 = vst [vmem:[#allocation5 + $0x58] sm:$0xff] %v66
    %89 = vst [vmem:[#allocation5 + $0x60] sm:$0xff] %v63
    %90 = vst [vmem:[#allocation5 + $0x68] sm:$0xff] %v64
    %91 = vst [vmem:[#allocation5 + $0x70] sm:$0xff] %v61
    %92 = vst [vmem:[#allocation5 + $0x78] sm:$0xff] %v62
    %v93 = vld [vmem:[#allocation2] sm:$0xff]
    %v94 = vld [vmem:[#allocation2 + $0x8] sm:$0xff]
    %v95 = vld [vmem:[#allocation2 + $0x10] sm:$0xff]
    %v96 = vld [vmem:[#allocation2 + $0x18] sm:$0xff]
    %v97 = vld [vmem:[#allocation2 + $0x20] sm:$0xff]
    %v98 = vld [vmem:[#allocation2 + $0x28] sm:$0xff]
    %v99 = vld [vmem:[#allocation2 + $0x30] sm:$0xff]
    %v100 = vld [vmem:[#allocation2 + $0x38] sm:$0xff]
    %v101 = vld [vmem:[#allocation2 + $0x40] sm:$0xff]
    %v102 = vld [vmem:[#allocation2 + $0x48] sm:$0xff]
    %v103 = vld [vmem:[#allocation2 + $0x50] sm:$0xff]
    %v104 = vld [vmem:[#allocation2 + $0x58] sm:$0xff]
    %v105 = vld [vmem:[#allocation2 + $0x60] sm:$0xff]
    %v106 = vld [vmem:[#allocation2 + $0x68] sm:$0xff]
    %v107 = vld [vmem:[#allocation2 + $0x70] sm:$0xff]
    %v108 = vld [vmem:[#allocation2 + $0x78] sm:$0xff]
    %109 = vrot.lane.b32.xlu0 %v93, 1
    %v110 = vpop.permute.xlu0 %109
    %111 = vrot.lane.b32.xlu0 %v95, 1
    %v112 = vpop.permute.xlu0 %111
    %113 = vrot.lane.b32.xlu0 %v97, 1
    %v114 = vpop.permute.xlu0 %113
    %115 = vrot.lane.b32.xlu0 %v99, 1
    %v116 = vpop.permute.xlu0 %115
    %117 = vrot.lane.b32.xlu0 %v101, 1
    %v118 = vpop.permute.xlu0 %117
    %119 = vrot.lane.b32.xlu0 %v103, 1
    %v120 = vpop.permute.xlu0 %119
    %121 = vrot.lane.b32.xlu0 %v105, 1
    %v122 = vpop.permute.xlu0 %121
    %123 = vrot.lane.b32.xlu0 %v107, 1
    %v124 = vpop.permute.xlu0 %123
    %125 = vrot.lane.b32.xlu0 %v94, 1
    %v126 = vpop.permute.xlu0 %125
    %127 = vrot.lane.b32.xlu0 %v96, 1
    %v128 = vpop.permute.xlu0 %127
    %129 = vrot.lane.b32.xlu0 %v98, 1
    %v130 = vpop.permute.xlu0 %129
    %131 = vrot.lane.b32.xlu0 %v100, 1
    %v132 = vpop.permute.xlu0 %131
    %133 = vrot.lane.b32.xlu0 %v102, 1
    %v134 = vpop.permute.xlu0 %133
    %135 = vrot.lane.b32.xlu0 %v104, 1
    %v136 = vpop.permute.xlu0 %135
    %137 = vrot.lane.b32.xlu0 %v106, 1
    %v138 = vpop.permute.xlu0 %137
    %139 = vrot.lane.b32.xlu0 %v108, 1
    %v140 = vpop.permute.xlu0 %139
    %v141 = vlaneseq
    %v142 = vand.u32 %v141, 127
    %vm143 = vcmp.lt.s32.totalorder %v142, 1
    %v144 = vsel %vm143, %v110, %v126
    %v145 = vsel %vm143, %v112, %v128
    %v146 = vsel %vm143, %v114, %v130
    %v147 = vsel %vm143, %v116, %v132
    %v148 = vsel %vm143, %v118, %v134
    %v149 = vsel %vm143, %v120, %v136
    %v150 = vsel %vm143, %v122, %v138
    %v151 = vsel %vm143, %v124, %v140
    %v152 = vsel %vm143, %v126, %v110
    %v153 = vsel %vm143, %v128, %v112
    %v154 = vsel %vm143, %v130, %v114
    %v155 = vsel %vm143, %v132, %v116
    %v156 = vsel %vm143, %v134, %v118
    %v157 = vsel %vm143, %v136, %v120
    %v158 = vsel %vm143, %v138, %v122
    %v159 = vsel %vm143, %v140, %v124
    %160 = vst [vmem:[#allocation6] sm:$0xff] %v152
    %161 = vst [vmem:[#allocation6 + $0x8] sm:$0xff] %v144
    %162 = vst [vmem:[#allocation6 + $0x10] sm:$0xff] %v153
    %163 = vst [vmem:[#allocation6 + $0x18] sm:$0xff] %v145
    %164 = vst [vmem:[#allocation6 + $0x20] sm:$0xff] %v154
    %165 = vst [vmem:[#allocation6 + $0x28] sm:$0xff] %v146
    %166 = vst [vmem:[#allocation6 + $0x30] sm:$0xff] %v155
    %167 = vst [vmem:[#allocation6 + $0x38] sm:$0xff] %v147
    %168 = vst [vmem:[#allocation6 + $0x40] sm:$0xff] %v156
    %169 = vst [vmem:[#allocation6 + $0x48] sm:$0xff] %v148
    %170 = vst [vmem:[#allocation6 + $0x50] sm:$0xff] %v157
    %171 = vst [vmem:[#allocation6 + $0x58] sm:$0xff] %v149
    %172 = vst [vmem:[#allocation6 + $0x60] sm:$0xff] %v158
    %173 = vst [vmem:[#allocation6 + $0x68] sm:$0xff] %v150
    %174 = vst [vmem:[#allocation6 + $0x70] sm:$0xff] %v159
    %175 = vst [vmem:[#allocation6 + $0x78] sm:$0xff] %v151
    // Predicated region
    $region10: #{tpu_custom_call.1} parent=1 // pred_check
      _
    $region11: #{tpu_custom_call.1} parent=1 // pred_check_branch
      %177 = sbr.rel (0) target = $region13
    $region12: #{tpu_custom_call.1} parent=1 // pred_region
      %s179 = ssub.s32 2048, 2048
      %180 = vsyncadd [#allocation4], %s179
      %s181 = sshll.u32 [#allocation5], 4
      %s182 = int_to_ptr.vmem [resolvable:$true] %s181
      %187 = dma.vmem_to_hbm [thread:$0]  %s182, 2048, %s1, [#allocation4], 256, 256, 16
    $region13: #{tpu_custom_call.1} parent=1 // pred_fallthru
      _
    // Predicated region
    $region14: #{tpu_custom_call.1} parent=1 // pred_check
      _
    $region15: #{tpu_custom_call.1} parent=1 // pred_check_branch
      %189 = sbr.rel (0) target = $region17
    $region16: #{tpu_custom_call.1} parent=1 // pred_region
      %s191 = ssub.s32 2048, 2048
      %192 = vsyncadd [#allocation7], %s191
      %s193 = sshll.u32 [#allocation6], 4
      %s194 = int_to_ptr.vmem [resolvable:$true] %s193
      %199 = dma.vmem_to_hbm [thread:$0]  %s194, 2048, %s2, [#allocation7], 256, 256, 16
    $region17: #{tpu_custom_call.1} parent=1 // pred_fallthru
      _
    // Predicated region
    $region18: #{tpu_custom_call.1} parent=1 // pred_check
      _
    $region19: #{tpu_custom_call.1} parent=1 // pred_check_branch
      %201 = sbr.rel (0) target = $region21
    $region20: #{tpu_custom_call.1} parent=1 // pred_region
      %202 = dma.done [#allocation4], 2048
    $region21: #{tpu_custom_call.1} parent=1 // pred_fallthru
      _
    // Predicated region
    $region22: #{tpu_custom_call.1} parent=1 // pred_check
      _
    $region23: #{tpu_custom_call.1} parent=1 // pred_check_branch
      %204 = sbr.rel (0) target = $region25
    $region24: #{tpu_custom_call.1} parent=1 // pred_region
      %205 = dma.done [#allocation7], 2048
    $region25: #{tpu_custom_call.1} parent=1 // pred_fallthru
      _
    %206 = vsyncpa [#allocation3], 1
    %207 = vsyncpa [#allocation4], 1
    %208 = vsyncpa [#allocation7], 1

</llo_original>
